<compile_context>
chip_gen: v6e
topology: v6e:2x2x1
jax: 0.10.0
libtpu: 0.0.40
codegen_flags: <defaults>
</compile_context>

<pallas_src>
import functools

import numpy as np
import jax
import jax.numpy as jnp
from jax import lax
from jax.experimental import pallas as pl
from jax.experimental.pallas import tpu as pltpu


# ----------------------------------------------------------------------------
# best_periodic_translation (tiny scalar glue, identical to the torch fn)
# ----------------------------------------------------------------------------
def best_periodic_translation(pos1, pos2, box_vectors):
    delta = pos2 - pos1
    inv_box_size = 1.0 / jnp.diag(box_vectors)
    scale3 = jnp.round(delta[2] * inv_box_size[2])
    delta = delta - scale3 * box_vectors[2]
    scale2 = jnp.round(delta[1] * inv_box_size[1])
    delta = delta - scale2 * box_vectors[1]
    scale1 = jnp.round(delta[0] * inv_box_size[0])
    delta = delta - scale1 * box_vectors[0]
    return scale1 * box_vectors[0] + scale2 * box_vectors[1] + scale3 * box_vectors[2]


# ----------------------------------------------------------------------------
# In-kernel helpers: everything works on (3, N) slabs (xyz = sublanes)
# ----------------------------------------------------------------------------
def _rows_m1(v):            # rows [1, 2, 0]
    return jnp.concatenate([v[1:3], v[0:1]], axis=0)


def _rows_m2(v):            # rows [2, 0, 1]
    return jnp.concatenate([v[2:3], v[0:2]], axis=0)


def _cross3(u, v):
    # component i:  u[(i+1)%3] * v[(i+2)%3] - u[(i+2)%3] * v[(i+1)%3]
    return _rows_m1(u) * _rows_m2(v) - _rows_m2(u) * _rows_m1(v)


def _apply_chain_shifts(x, tail, shifts, first_mask_row, n_chains):
    # x: (3, T); shifts[:, c]: PBC translation for chain c; tail rows: 0/1 masks
    for c in range(n_chains):
        cm = tail[first_mask_row + c: first_mask_row + c + 1, :]   # (1, T)
        x = x + shifts[:, c:c + 1] * cm                            # (3,1)*(1,T)
    return x


# ----------------------------------------------------------------------------
# Pass 1: lane-tiled reduction  ->  (3, 3) = [sum_x | sum_g | sum_cross]
#   tail_reduce rows: 0-2 scattered ref_poc | 3 pocket mask | 4.. chain masks
# ----------------------------------------------------------------------------
def _reduce_kernel(rec_ref, tail_ref, shift_ref, sums_ref, *, n_chains):
    t = pl.program_id(0)
    tail = tail_ref[...]                        # (4 + n_chains, T)
    shifts = shift_ref[...]                     # (3, n_chains + 1)
    x = _apply_chain_shifts(rec_ref[...], tail, shifts, 4, n_chains)   # (3, T)

    ref = tail[0:3, :]                          # scattered ref_poc (0 elsewhere)
    pmask = tail[3:4, :]                        # 1.0 at pocket lanes
    g = (x - ref) * pmask                       # unscaled pocket restraint

    c0 = shifts[:, n_chains:n_chains + 1]       # static pre-center (3, 1)
    cyg = _cross3(x - c0, g)                    # zero off-pocket / padding lanes

    part = jnp.concatenate(
        [jnp.sum(x, axis=1, keepdims=True),     # padding lanes are exact zeros
         jnp.sum(g, axis=1, keepdims=True),
         jnp.sum(cyg, axis=1, keepdims=True)], axis=1)   # (3, 3)

    @pl.when(t == 0)
    def _init():
        sums_ref[...] = jnp.zeros_like(sums_ref)

    sums_ref[...] += part                       # output block resident (arbitrary axis)


# ----------------------------------------------------------------------------
# Pass 2: lane-tiled application  ->  (3, tile) force rows per grid step
#   tail_apply rows: 0 valid mask | 1.. chain masks
# ----------------------------------------------------------------------------
def _apply_kernel(rec_ref, tail_ref, shift_ref, sums_ref, out_ref, *,
                  n_chains, inv_n, scale):
    tail = tail_ref[...]                        # (1 + n_chains, T)
    shifts = shift_ref[...]                     # (3, n_chains + 1)
    x = _apply_chain_shifts(rec_ref[...], tail, shifts, 1, n_chains)   # (3, T)
    valid = tail[0:1, :]                        # 1.0 at real-atom lanes

    sums = sums_ref[...]                        # (3, 3): [sum_x | sum_g | sum_cyg]
    sum_x, sum_g, sum_c = sums[:, 0:1], sums[:, 1:2], sums[:, 2:3]
    c0 = shifts[:, n_chains:n_chains + 1]
    origin = sum_x * jnp.float32(inv_n)                                 # (3, 1)
    f_mean = sum_g * jnp.float32(scale)                                 # (3, 1)
    torque_mean = (sum_c - _cross3(origin - c0, sum_g)) * jnp.float32(scale)

    a = x - origin                                                      # (3, T)
    r_sq = jnp.sum(a * a, axis=0, keepdims=True)                        # (1, T)
    r_safe = jnp.where(valid > 0.0, r_sq, jnp.float32(1.0))
    inv_r = pl.reciprocal(r_safe, approx=True)                          # EUP slot
    inv_r = inv_r * (jnp.float32(2.0) - r_safe * inv_r)                 # Newton step

    f_rot = _cross3(torque_mean, a) * inv_r                             # (3, T)
    out_ref[...] = f_mean + f_rot               # single combined (3, T) store


# ----------------------------------------------------------------------------
# One-time preparation of everything that depends only on the topology/params
# ----------------------------------------------------------------------------
def prepare_alignment(params, n_atoms, lane_tile=2048):
    rec_idx = np.asarray(params["rec_indices"])
    poc_idx = np.asarray(params["poc_indices"])
    ref_poc = np.asarray(params["ref_poc"], np.float32)
    n_rec = int(rec_idx.shape[0])
    n_chains = len(params["chains"])

    if n_rec <= lane_tile:
        n_pad = max(128, ((n_rec + 127) // 128) * 128)
        tile = n_pad
    else:
        n_pad = ((n_rec + lane_tile - 1) // lane_tile) * lane_tile
        tile = lane_tile
    n_tiles = n_pad // tile

    ref_full = np.zeros((3, n_pad), np.float32)
    ref_full[:, poc_idx] = ref_poc.T
    pmask = np.zeros((1, n_pad), np.float32)
    pmask[0, poc_idx] = 1.0
    valid = np.zeros((1, n_pad), np.float32)
    valid[0, :n_rec] = 1.0
    cmask = np.zeros((n_chains, n_pad), np.float32)
    poc_chain_indices, ref_chain_coms = [], []
    for ci, ch in enumerate(params["chains"]):
        cmask[ci, :n_rec] = np.asarray(ch["chain_mask"], np.float32)
        poc_chain_indices.append(jnp.asarray(ch["poc_chain_indices"], jnp.int32))
        ref_chain_coms.append(jnp.asarray(ch["ref_poc_chain_com"], jnp.float32))

    contiguous = n_rec > 0 and np.array_equal(
        rec_idx, np.arange(rec_idx[0], rec_idx[0] + n_rec))

    return dict(
        rec_indices=jnp.asarray(rec_idx, jnp.int32),
        tail_reduce=jnp.asarray(np.concatenate([ref_full, pmask, cmask], axis=0)),
        tail_apply=jnp.asarray(np.concatenate([valid, cmask], axis=0)),
        poc_chain_indices=poc_chain_indices,
        ref_chain_coms=ref_chain_coms,
        c0=jnp.asarray(ref_poc.mean(axis=0), jnp.float32),
        scale=-2.0 * float(params["k"]) / n_rec,
        inv_n=1.0 / n_rec,
        n_rec=n_rec, n_pad=n_pad, tile=tile, n_tiles=n_tiles,
        n_chains=n_chains, n_atoms=int(n_atoms),
        contiguous=bool(contiguous),
        rec_start=int(rec_idx[0]) if n_rec > 0 else 0,
    )


# ----------------------------------------------------------------------------
# Forward-pass factory (jitted; minimal per-call glue)
# ----------------------------------------------------------------------------
def make_alignment_force(prepared):
    p = prepared
    n_rec, n_pad, tile, n_tiles = p["n_rec"], p["n_pad"], p["tile"], p["n_tiles"]
    n_chains, n_atoms = p["n_chains"], p["n_atoms"]
    rec_indices = p["rec_indices"]
    tail_reduce, tail_apply = p["tail_reduce"], p["tail_apply"]
    poc_chain_indices, ref_chain_coms = p["poc_chain_indices"], p["ref_chain_coms"]
    c0 = p["c0"]

    reduce_call = pl.pallas_call(
        functools.partial(_reduce_kernel, n_chains=n_chains),
        out_shape=jax.ShapeDtypeStruct((3, 3), jnp.float32),
        grid=(n_tiles,),
        in_specs=[
            pl.BlockSpec((3, tile), lambda t: (0, t)),                 # rec rows
            pl.BlockSpec((4 + n_chains, tile), lambda t: (0, t)),      # static tail
            pl.BlockSpec((3, n_chains + 1), lambda t: (0, 0)),         # PBC shifts + c0
        ],
        out_specs=pl.BlockSpec((3, 3), lambda t: (0, 0)),              # resident sums
        compiler_params=pltpu.CompilerParams(dimension_semantics=("arbitrary",)),
    )

    apply_call = pl.pallas_call(
        functools.partial(_apply_kernel, n_chains=n_chains,
                          inv_n=p["inv_n"], scale=p["scale"]),
        out_shape=jax.ShapeDtypeStruct((3, n_pad), jnp.float32),
        grid=(n_tiles,),
        in_specs=[
            pl.BlockSpec((3, tile), lambda t: (0, t)),                 # rec rows
            pl.BlockSpec((1 + n_chains, tile), lambda t: (0, t)),      # static tail
            pl.BlockSpec((3, n_chains + 1), lambda t: (0, 0)),         # PBC shifts + c0
            pl.BlockSpec((3, 3), lambda t: (0, 0)),                    # reduction sums
        ],
        out_specs=pl.BlockSpec((3, tile), lambda t: (0, t)),
        compiler_params=pltpu.CompilerParams(dimension_semantics=("parallel",)),
    )

    @jax.jit
    def forward(positions, box_vectors):
        # dynamic glue: gather rec positions into the (3, n_pad) slab layout
        # TODO(synk): for very large systems the rec gather could move in-kernel
        # via a manual DMA gather; XLA's rank-1 gather is fine at these sizes.
        rec_pos = positions[rec_indices].astype(jnp.float32)           # (n_rec, 3)
        rec_t = jnp.pad(rec_pos.T, ((0, 0), (0, n_pad - n_rec)))       # (3, n_pad)

        # tiny per-chain PBC translations; last column = static pre-center c0
        cols = []
        for ci in range(n_chains):
            com = positions[poc_chain_indices[ci]].mean(axis=0)
            cols.append(best_periodic_translation(com, ref_chain_coms[ci], box_vectors))
        shifts = jnp.stack(cols + [c0], axis=1).astype(jnp.float32)    # (3, n_chains+1)

        sums = reduce_call(rec_t, tail_reduce, shifts)                 # (3, 3)
        out_t = apply_call(rec_t, tail_apply, shifts, sums)            # (3, n_pad)
        f_rec = out_t[:, :n_rec].T.astype(positions.dtype)             # (n_rec, 3)

        # TODO(synk): in production, donate/alias the caller's force buffer and
        # scatter-add F_rec into it (this O(n_atoms) zero-fill + write dominates
        # HBM traffic when n_atoms >> n_rec).
        zeros = jnp.zeros((n_atoms, 3), positions.dtype)
        if p["contiguous"]:
            f_final = lax.dynamic_update_slice(zeros, f_rec, (p["rec_start"], 0))
        else:
            f_final = zeros.at[rec_indices].set(f_rec)
        return jnp.float32(0.0), f_final

    return forward


# ----------------------------------------------------------------------------
# Pure-numpy reference (mirrors the torch forward exactly) for self-check
# ----------------------------------------------------------------------------
def alignment_force_reference(positions, box_vectors, params):
    positions = np.asarray(positions)
    box_vectors = np.asarray(box_vectors)
    rec_indices = np.asarray(params["rec_indices"])
    poc_indices = np.asarray(params["poc_indices"])
    ref_poc = np.asarray(params["ref_poc"], np.float32)
    k = np.float32(params["k"])

    rec_pos = positions[rec_indices].copy()
    for ch in params["chains"]:
        poc_chain_pos = positions[np.asarray(ch["poc_chain_indices"])]
        com = poc_chain_pos.mean(0)
        delta = np.asarray(ch["ref_poc_chain_com"], np.float32) - com
        inv = 1.0 / np.diag(box_vectors)
        s3 = np.round(delta[2] * inv[2]); delta = delta - s3 * box_vectors[2]
        s2 = np.round(delta[1] * inv[1]); delta = delta - s2 * box_vectors[1]
        s1 = np.round(delta[0] * inv[0]); delta = delta - s1 * box_vectors[0]
        best_t = s1 * box_vectors[0] + s2 * box_vectors[1] + s3 * box_vectors[2]
        rec_pos = rec_pos + best_t * np.asarray(ch["chain_mask"])[:, None].astype(np.float32)

    poc_pos = rec_pos[poc_indices]
    rec_origin = rec_pos.mean(0)
    rec_centered = rec_pos - rec_origin
    r_sq = (rec_centered ** 2).sum(1)
    F = np.zeros_like(rec_pos)
    F[poc_indices] = -2.0 * k * (poc_pos - ref_poc)
    F_mean = F.mean(0)
    torque = np.cross(rec_centered, F)
    torque_mean = torque.mean(0)
    F_rot = np.cross(torque_mean[None], rec_centered) / r_sq[:, None]
    F_final = np.zeros_like(positions)
    F_final[rec_indices] = F_mean + F_rot
    return np.float32(0.0), F_final


# ----------------------------------------------------------------------------
if __name__ == "__main__":
    key = jax.random.PRNGKey(0)
    k_pos, k_ref = jax.random.split(key)

    n_atoms, n_rec, n_poc = 80, 48, 16

    # Deterministic synthetic "topology" buffers (module __init__ equivalents)
    rec_indices = np.arange(10, 10 + n_rec, dtype=np.int32)        # rec atoms in positions
    chain_ids = np.concatenate([np.zeros(24, np.int32), np.ones(24, np.int32)])
    poc_indices = np.array([2, 5, 7, 11, 13, 17, 20, 23,
                            26, 29, 31, 35, 37, 41, 44, 47], np.int32)  # indices into rec
    poc_chain_ids = chain_ids[poc_indices]

    positions = jax.random.uniform(k_pos, (n_atoms, 3), jnp.float32, 0.0, 6.0)
    ref_poc = np.asarray(jax.random.uniform(k_ref, (n_poc, 3), jnp.float32, 0.0, 4.0))
    box_vectors = jnp.array([[3.5, 0.0, 0.0],
                             [0.2, 4.0, 0.0],
                             [0.1, 0.3, 4.5]], jnp.float32)
    k_const = np.float32(100.0)   # kJ/mol/nm^2

    chains = []
    for cid in np.unique(poc_chain_ids).tolist():
        poc_chain_mask = poc_chain_ids == cid
        chain_mask = chain_ids == cid
        chains.append(dict(
            chain_mask=chain_mask,
            poc_chain_indices=poc_indices[poc_chain_mask],
            ref_poc_chain_com=ref_poc[poc_chain_mask].mean(axis=0).astype(np.float32),
        ))

    params = dict(rec_indices=rec_indices, poc_indices=poc_indices,
                  ref_poc=ref_poc, k=k_const, chains=chains)

    prepared = prepare_alignment(params, n_atoms)
    alignment_force = make_alignment_force(prepared)

    energy, F_final = alignment_force(positions, box_vectors)
    F_final = jax.block_until_ready(F_final)

    e_ref, F_ref = alignment_force_reference(positions, box_vectors, params)
    assert float(energy) == 0.0
    assert np.allclose(np.asarray(F_final), F_ref, rtol=1e-4, atol=1e-3), \
        np.abs(np.asarray(F_final) - F_ref).max()

    print("KERNEL_OK")
</pallas_src>

<mosaic_0001>
module attributes {stable_mosaic.version = 11 : i64} {
  func.func @_reduce_kernel(%arg0: i32, %arg1: memref<3x128xf32, #tpu.memory_space<vmem>>, %arg2: memref<6x128xf32, #tpu.memory_space<vmem>>, %arg3: memref<3x3xf32, #tpu.memory_space<vmem>>, %arg4: memref<3x3xf32, #tpu.memory_space<vmem>>) attributes {dimension_semantics = [#tpu.dimension_semantics<arbitrary>], iteration_bounds = array<i64: 1>, scalar_prefetch = 0 : i64, scratch_operands = 0 : i64, tpu.core_type = #tpu.core_type<tc>, window_params = [{transform_indices = @transform_0, window_bounds = array<i64: 3, 128>}, {transform_indices = @transform_1, window_bounds = array<i64: 6, 128>}, {pipeline_mode = #tpu.pipeline_mode<synchronous>, transform_indices = @transform_2, window_bounds = array<i64: 3, 3>}, {pipeline_mode = #tpu.pipeline_mode<synchronous>, transform_indices = @transform_3, window_bounds = array<i64: 3, 3>}]} {
    %c0 = arith.constant 0 : index
    %c0_0 = arith.constant 0 : index
    %0 = vector.load %arg2[%c0, %c0_0] : memref<6x128xf32, #tpu.memory_space<vmem>>, vector<6x128xf32>
    %c0_1 = arith.constant 0 : index
    %c0_2 = arith.constant 0 : index
    %1 = vector.load %arg3[%c0_1, %c0_2] : memref<3x3xf32, #tpu.memory_space<vmem>>, vector<3x3xf32>
    %c0_3 = arith.constant 0 : index
    %c0_4 = arith.constant 0 : index
    %2 = vector.load %arg1[%c0_3, %c0_4] : memref<3x128xf32, #tpu.memory_space<vmem>>, vector<3x128xf32>
    %3 = vector.extract_strided_slice %0 {offsets = [4, 0], sizes = [1, 128], strides = [1, 1]} : vector<6x128xf32> to vector<1x128xf32>
    %4 = vector.extract_strided_slice %1 {offsets = [0, 0], sizes = [3, 1], strides = [1, 1]} : vector<3x3xf32> to vector<3x1xf32>
    %5 = vector.broadcast %4 : vector<3x1xf32> to vector<3x128xf32>
    %6 = vector.broadcast %3 : vector<1x128xf32> to vector<3x128xf32>
    %7 = arith.mulf %5, %6 : vector<3x128xf32>
    %8 = arith.addf %2, %7 : vector<3x128xf32>
    %9 = vector.extract_strided_slice %0 {offsets = [5, 0], sizes = [1, 128], strides = [1, 1]} : vector<6x128xf32> to vector<1x128xf32>
    %10 = vector.extract_strided_slice %1 {offsets = [0, 1], sizes = [3, 1], strides = [1, 1]} : vector<3x3xf32> to vector<3x1xf32>
    %11 = vector.broadcast %10 : vector<3x1xf32> to vector<3x128xf32>
    %12 = vector.broadcast %9 : vector<1x128xf32> to vector<3x128xf32>
    %13 = arith.mulf %11, %12 : vector<3x128xf32>
    %14 = arith.addf %8, %13 : vector<3x128xf32>
    %15 = vector.extract_strided_slice %0 {offsets = [0, 0], sizes = [3, 128], strides = [1, 1]} : vector<6x128xf32> to vector<3x128xf32>
    %16 = vector.extract_strided_slice %0 {offsets = [3, 0], sizes = [1, 128], strides = [1, 1]} : vector<6x128xf32> to vector<1x128xf32>
    %17 = arith.subf %14, %15 : vector<3x128xf32>
    %18 = vector.broadcast %16 : vector<1x128xf32> to vector<3x128xf32>
    %19 = arith.mulf %17, %18 : vector<3x128xf32>
    %20 = vector.extract_strided_slice %1 {offsets = [0, 2], sizes = [3, 1], strides = [1, 1]} : vector<3x3xf32> to vector<3x1xf32>
    %21 = vector.broadcast %20 : vector<3x1xf32> to vector<3x128xf32>
    %22 = arith.subf %14, %21 : vector<3x128xf32>
    %23 = vector.extract_strided_slice %22 {offsets = [1, 0], sizes = [2, 128], strides = [1, 1]} : vector<3x128xf32> to vector<2x128xf32>
    %24 = vector.extract_strided_slice %22 {offsets = [0, 0], sizes = [1, 128], strides = [1, 1]} : vector<3x128xf32> to vector<1x128xf32>
    %25 = tpu.concatenate %23, %24 in 0 : vector<2x128xf32>, vector<1x128xf32> -> vector<3x128xf32>
    %26 = vector.extract_strided_slice %19 {offsets = [2, 0], sizes = [1, 128], strides = [1, 1]} : vector<3x128xf32> to vector<1x128xf32>
    %27 = vector.extract_strided_slice %19 {offsets = [0, 0], sizes = [2, 128], strides = [1, 1]} : vector<3x128xf32> to vector<2x128xf32>
    %28 = tpu.concatenate %26, %27 in 0 : vector<1x128xf32>, vector<2x128xf32> -> vector<3x128xf32>
    %29 = arith.mulf %25, %28 : vector<3x128xf32>
    %30 = vector.extract_strided_slice %22 {offsets = [2, 0], sizes = [1, 128], strides = [1, 1]} : vector<3x128xf32> to vector<1x128xf32>
    %31 = vector.extract_strided_slice %22 {offsets = [0, 0], sizes = [2, 128], strides = [1, 1]} : vector<3x128xf32> to vector<2x128xf32>
    %32 = tpu.concatenate %30, %31 in 0 : vector<1x128xf32>, vector<2x128xf32> -> vector<3x128xf32>
    %33 = vector.extract_strided_slice %19 {offsets = [1, 0], sizes = [2, 128], strides = [1, 1]} : vector<3x128xf32> to vector<2x128xf32>
    %34 = vector.extract_strided_slice %19 {offsets = [0, 0], sizes = [1, 128], strides = [1, 1]} : vector<3x128xf32> to vector<1x128xf32>
    %35 = tpu.concatenate %33, %34 in 0 : vector<2x128xf32>, vector<1x128xf32> -> vector<3x128xf32>
    %36 = arith.mulf %32, %35 : vector<3x128xf32>
    %37 = arith.subf %29, %36 : vector<3x128xf32>
    %cst = arith.constant dense<0.000000e+00> : vector<3xf32>
    %38 = vector.multi_reduction <add>, %14, %cst [1] : vector<3x128xf32> to vector<3xf32>
    %39 = vector.shape_cast %38 : vector<3xf32> to vector<3x1xf32>
    %cst_5 = arith.constant dense<0.000000e+00> : vector<3xf32>
    %40 = vector.multi_reduction <add>, %19, %cst_5 [1] : vector<3x128xf32> to vector<3xf32>
    %41 = vector.shape_cast %40 : vector<3xf32> to vector<3x1xf32>
    %cst_6 = arith.constant dense<0.000000e+00> : vector<3xf32>
    %42 = vector.multi_reduction <add>, %37, %cst_6 [1] : vector<3x128xf32> to vector<3xf32>
    %43 = vector.shape_cast %42 : vector<3xf32> to vector<3x1xf32>
    %44 = tpu.concatenate %39, %41, %43 in 1 : vector<3x1xf32>, vector<3x1xf32>, vector<3x1xf32> -> vector<3x3xf32>
    %c0_i32 = arith.constant 0 : i32
    %45 = arith.cmpi eq, %arg0, %c0_i32 : i32
    %46 = arith.extui %45 : i1 to i32
    %c0_i32_7 = arith.constant 0 : i32
    %47 = arith.cmpi ne, %46, %c0_i32_7 : i32
    scf.if %47 {
      %cst_12 = arith.constant 0.000000e+00 : f32
      %51 = vector.broadcast %cst_12 : f32 to vector<3x3xf32>
      %c0_13 = arith.constant 0 : index
      %c0_14 = arith.constant 0 : index
      %52 = vector.load %arg4[%c0_13, %c0_14] : memref<3x3xf32, #tpu.memory_space<vmem>>, vector<3x3xf32>
      tpu.vector_store %arg4[%c0_13, %c0_14], %51 {strides = array<i32>} : memref<3x3xf32, #tpu.memory_space<vmem>>, vector<3x3xf32>,
    } else {
    }
    %c0_8 = arith.constant 0 : index
    %c0_9 = arith.constant 0 : index
    %48 = vector.load %arg4[%c0_8, %c0_9] : memref<3x3xf32, #tpu.memory_space<vmem>>, vector<3x3xf32>
    %49 = arith.addf %48, %44 : vector<3x3xf32>
    %c0_10 = arith.constant 0 : index
    %c0_11 = arith.constant 0 : index
    %50 = vector.load %arg4[%c0_10, %c0_11] : memref<3x3xf32, #tpu.memory_space<vmem>>, vector<3x3xf32>
    tpu.vector_store %arg4[%c0_10, %c0_11], %49 {strides = array<i32>} : memref<3x3xf32, #tpu.memory_space<vmem>>, vector<3x3xf32>,
    return
  }
  func.func @transform_0(%arg0: i32) -> (i32, i32) {
    %c0_i32 = arith.constant 0 : i32
    %c0_i32_0 = arith.constant 0 : i32
    return %c0_i32, %arg0 : i32, i32
  }
  func.func @transform_1(%arg0: i32) -> (i32, i32) {
    %c0_i32 = arith.constant 0 : i32
    %c0_i32_0 = arith.constant 0 : i32
    return %c0_i32, %arg0 : i32, i32
  }
  func.func @transform_2(%arg0: i32) -> (i32, i32) {
    %c0_i32 = arith.constant 0 : i32
    %c0_i32_0 = arith.constant 0 : i32
    %c0_i32_1 = arith.constant 0 : i32
    return %c0_i32, %c0_i32_0 : i32, i32
  }
  func.func @transform_3(%arg0: i32) -> (i32, i32) {
    %c0_i32 = arith.constant 0 : i32
    %c0_i32_0 = arith.constant 0 : i32
    %c0_i32_1 = arith.constant 0 : i32
    return %c0_i32, %c0_i32_0 : i32, i32
  }
}

module attributes {stable_mosaic.version = 11 : i64} {
  func.func @_apply_kernel(%arg0: i32, %arg1: memref<3x128xf32, #tpu.memory_space<vmem>>, %arg2: memref<3x128xf32, #tpu.memory_space<vmem>>, %arg3: memref<3x3xf32, #tpu.memory_space<vmem>>, %arg4: memref<3x3xf32, #tpu.memory_space<vmem>>, %arg5: memref<3x128xf32, #tpu.memory_space<vmem>>) attributes {dimension_semantics = [#tpu.dimension_semantics<parallel>], iteration_bounds = array<i64: 1>, scalar_prefetch = 0 : i64, scratch_operands = 0 : i64, tpu.core_type = #tpu.core_type<tc>, window_params = [{transform_indices = @transform_0, window_bounds = array<i64: 3, 128>}, {transform_indices = @transform_1, window_bounds = array<i64: 3, 128>}, {pipeline_mode = #tpu.pipeline_mode<synchronous>, transform_indices = @transform_2, window_bounds = array<i64: 3, 3>}, {pipeline_mode = #tpu.pipeline_mode<synchronous>, transform_indices = @transform_3, window_bounds = array<i64: 3, 3>}, {transform_indices = @transform_4, window_bounds = array<i64: 3, 128>}]} {
    %c0 = arith.constant 0 : index
    %c0_0 = arith.constant 0 : index
    %0 = vector.load %arg2[%c0, %c0_0] : memref<3x128xf32, #tpu.memory_space<vmem>>, vector<3x128xf32>
    %c0_1 = arith.constant 0 : index
    %c0_2 = arith.constant 0 : index
    %1 = vector.load %arg3[%c0_1, %c0_2] : memref<3x3xf32, #tpu.memory_space<vmem>>, vector<3x3xf32>
    %c0_3 = arith.constant 0 : index
    %c0_4 = arith.constant 0 : index
    %2 = vector.load %arg1[%c0_3, %c0_4] : memref<3x128xf32, #tpu.memory_space<vmem>>, vector<3x128xf32>
    %3 = vector.extract_strided_slice %0 {offsets = [1, 0], sizes = [1, 128], strides = [1, 1]} : vector<3x128xf32> to vector<1x128xf32>
    %4 = vector.extract_strided_slice %1 {offsets = [0, 0], sizes = [3, 1], strides = [1, 1]} : vector<3x3xf32> to vector<3x1xf32>
    %5 = vector.broadcast %4 : vector<3x1xf32> to vector<3x128xf32>
    %6 = vector.broadcast %3 : vector<1x128xf32> to vector<3x128xf32>
    %7 = arith.mulf %5, %6 : vector<3x128xf32>
    %8 = arith.addf %2, %7 : vector<3x128xf32>
    %9 = vector.extract_strided_slice %0 {offsets = [2, 0], sizes = [1, 128], strides = [1, 1]} : vector<3x128xf32> to vector<1x128xf32>
    %10 = vector.extract_strided_slice %1 {offsets = [0, 1], sizes = [3, 1], strides = [1, 1]} : vector<3x3xf32> to vector<3x1xf32>
    %11 = vector.broadcast %10 : vector<3x1xf32> to vector<3x128xf32>
    %12 = vector.broadcast %9 : vector<1x128xf32> to vector<3x128xf32>
    %13 = arith.mulf %11, %12 : vector<3x128xf32>
    %14 = arith.addf %8, %13 : vector<3x128xf32>
    %15 = vector.extract_strided_slice %0 {offsets = [0, 0], sizes = [1, 128], strides = [1, 1]} : vector<3x128xf32> to vector<1x128xf32>
    %c0_5 = arith.constant 0 : index
    %c0_6 = arith.constant 0 : index
    %16 = vector.load %arg4[%c0_5, %c0_6] : memref<3x3xf32, #tpu.memory_space<vmem>>, vector<3x3xf32>
    %17 = vector.extract_strided_slice %16 {offsets = [0, 0], sizes = [3, 1], strides = [1, 1]} : vector<3x3xf32> to vector<3x1xf32>
    %18 = vector.extract_strided_slice %16 {offsets = [0, 1], sizes = [3, 1], strides = [1, 1]} : vector<3x3xf32> to vector<3x1xf32>
    %19 = vector.extract_strided_slice %16 {offsets = [0, 2], sizes = [3, 1], strides = [1, 1]} : vector<3x3xf32> to vector<3x1xf32>
    %20 = vector.extract_strided_slice %1 {offsets = [0, 2], sizes = [3, 1], strides = [1, 1]} : vector<3x3xf32> to vector<3x1xf32>
    %cst = arith.constant 0.020833334 : f32
    %21 = vector.broadcast %cst : f32 to vector<3x1xf32>
    %22 = arith.mulf %17, %21 : vector<3x1xf32>
    %cst_7 = arith.constant -4.16666651 : f32
    %23 = vector.broadcast %cst_7 : f32 to vector<3x1xf32>
    %24 = arith.mulf %18, %23 : vector<3x1xf32>
    %25 = arith.subf %22, %20 : vector<3x1xf32>
    %26 = vector.extract_strided_slice %25 {offsets = [1, 0], sizes = [2, 1], strides = [1, 1]} : vector<3x1xf32> to vector<2x1xf32>
    %27 = vector.extract_strided_slice %25 {offsets = [0, 0], sizes = [1, 1], strides = [1, 1]} : vector<3x1xf32> to vector<1x1xf32>
    %28 = tpu.concatenate %26, %27 in 0 : vector<2x1xf32>, vector<1x1xf32> -> vector<3x1xf32>
    %29 = vector.extract_strided_slice %18 {offsets = [2, 0], sizes = [1, 1], strides = [1, 1]} : vector<3x1xf32> to vector<1x1xf32>
    %30 = vector.extract_strided_slice %18 {offsets = [0, 0], sizes = [2, 1], strides = [1, 1]} : vector<3x1xf32> to vector<2x1xf32>
    %31 = tpu.concatenate %29, %30 in 0 : vector<1x1xf32>, vector<2x1xf32> -> vector<3x1xf32>
    %32 = arith.mulf %28, %31 : vector<3x1xf32>
    %33 = vector.extract_strided_slice %25 {offsets = [2, 0], sizes = [1, 1], strides = [1, 1]} : vector<3x1xf32> to vector<1x1xf32>
    %34 = vector.extract_strided_slice %25 {offsets = [0, 0], sizes = [2, 1], strides = [1, 1]} : vector<3x1xf32> to vector<2x1xf32>
    %35 = tpu.concatenate %33, %34 in 0 : vector<1x1xf32>, vector<2x1xf32> -> vector<3x1xf32>
    %36 = vector.extract_strided_slice %18 {offsets = [1, 0], sizes = [2, 1], strides = [1, 1]} : vector<3x1xf32> to vector<2x1xf32>
    %37 = vector.extract_strided_slice %18 {offsets = [0, 0], sizes = [1, 1], strides = [1, 1]} : vector<3x1xf32> to vector<1x1xf32>
    %38 = tpu.concatenate %36, %37 in 0 : vector<2x1xf32>, vector<1x1xf32> -> vector<3x1xf32>
    %39 = arith.mulf %35, %38 : vector<3x1xf32>
    %40 = arith.subf %32, %39 : vector<3x1xf32>
    %41 = arith.subf %19, %40 : vector<3x1xf32>
    %cst_8 = arith.constant -4.16666651 : f32
    %42 = vector.broadcast %cst_8 : f32 to vector<3x1xf32>
    %43 = arith.mulf %41, %42 : vector<3x1xf32>
    %44 = vector.broadcast %22 : vector<3x1xf32> to vector<3x128xf32>
    %45 = arith.subf %14, %44 : vector<3x128xf32>
    %46 = arith.mulf %45, %45 : vector<3x128xf32>
    %cst_9 = arith.constant dense<0.000000e+00> : vector<128xf32>
    %47 = vector.multi_reduction <add>, %46, %cst_9 [0] : vector<3x128xf32> to vector<128xf32>
    %48 = vector.shape_cast %47 : vector<128xf32> to vector<1x128xf32>
    %cst_10 = arith.constant 0.000000e+00 : f32
    %49 = vector.broadcast %cst_10 : f32 to vector<1x128xf32>
    %50 = arith.cmpf ogt, %15, %49 : vector<1x128xf32>
    %cst_11 = arith.constant 1.000000e+00 : f32
    %51 = vector.broadcast %cst_11 : f32 to vector<1x128xf32>
    %52 = arith.select %50, %48, %51 : vector<1x128xi1>, vector<1x128xf32>
    %53 = tpu.reciprocal %52 {approx = true} : vector<1x128xf32> -> vector<1x128xf32>
    %54 = arith.mulf %52, %53 : vector<1x128xf32>
    %cst_12 = arith.constant 2.000000e+00 : f32
    %55 = vector.broadcast %cst_12 : f32 to vector<1x128xf32>
    %56 = arith.subf %55, %54 : vector<1x128xf32>
    %57 = arith.mulf %53, %56 : vector<1x128xf32>
    %58 = vector.extract_strided_slice %43 {offsets = [1, 0], sizes = [2, 1], strides = [1, 1]} : vector<3x1xf32> to vector<2x1xf32>
    %59 = vector.extract_strided_slice %43 {offsets = [0, 0], sizes = [1, 1], strides = [1, 1]} : vector<3x1xf32> to vector<1x1xf32>
    %60 = tpu.concatenate %58, %59 in 0 : vector<2x1xf32>, vector<1x1xf32> -> vector<3x1xf32>
    %61 = vector.extract_strided_slice %45 {offsets = [2, 0], sizes = [1, 128], strides = [1, 1]} : vector<3x128xf32> to vector<1x128xf32>
    %62 = vector.extract_strided_slice %45 {offsets = [0, 0], sizes = [2, 128], strides = [1, 1]} : vector<3x128xf32> to vector<2x128xf32>
    %63 = tpu.concatenate %61, %62 in 0 : vector<1x128xf32>, vector<2x128xf32> -> vector<3x128xf32>
    %64 = vector.broadcast %60 : vector<3x1xf32> to vector<3x128xf32>
    %65 = arith.mulf %64, %63 : vector<3x128xf32>
    %66 = vector.extract_strided_slice %43 {offsets = [2, 0], sizes = [1, 1], strides = [1, 1]} : vector<3x1xf32> to vector<1x1xf32>
    %67 = vector.extract_strided_slice %43 {offsets = [0, 0], sizes = [2, 1], strides = [1, 1]} : vector<3x1xf32> to vector<2x1xf32>
    %68 = tpu.concatenate %66, %67 in 0 : vector<1x1xf32>, vector<2x1xf32> -> vector<3x1xf32>
    %69 = vector.extract_strided_slice %45 {offsets = [1, 0], sizes = [2, 128], strides = [1, 1]} : vector<3x128xf32> to vector<2x128xf32>
    %70 = vector.extract_strided_slice %45 {offsets = [0, 0], sizes = [1, 128], strides = [1, 1]} : vector<3x128xf32> to vector<1x128xf32>
    %71 = tpu.concatenate %69, %70 in 0 : vector<2x128xf32>, vector<1x128xf32> -> vector<3x128xf32>
    %72 = vector.broadcast %68 : vector<3x1xf32> to vector<3x128xf32>
    %73 = arith.mulf %72, %71 : vector<3x128xf32>
    %74 = arith.subf %65, %73 : vector<3x128xf32>
    %75 = vector.broadcast %57 : vector<1x128xf32> to vector<3x128xf32>
    %76 = arith.mulf %74, %75 : vector<3x128xf32>
    %77 = vector.broadcast %24 : vector<3x1xf32> to vector<3x128xf32>
    %78 = arith.addf %77, %76 : vector<3x128xf32>
    %c0_13 = arith.constant 0 : index
    %c0_14 = arith.constant 0 : index
    %79 = vector.load %arg5[%c0_13, %c0_14] : memref<3x128xf32, #tpu.memory_space<vmem>>, vector<3x128xf32>
    tpu.vector_store %arg5[%c0_13, %c0_14], %78 {strides = array<i32>} : memref<3x128xf32, #tpu.memory_space<vmem>>, vector<3x128xf32>,
    return
  }
  func.func @transform_0(%arg0: i32) -> (i32, i32) {
    %c0_i32 = arith.constant 0 : i32
    %c0_i32_0 = arith.constant 0 : i32
    return %c0_i32, %arg0 : i32, i32
  }
  func.func @transform_1(%arg0: i32) -> (i32, i32) {
    %c0_i32 = arith.constant 0 : i32
    %c0_i32_0 = arith.constant 0 : i32
    return %c0_i32, %arg0 : i32, i32
  }
  func.func @transform_2(%arg0: i32) -> (i32, i32) {
    %c0_i32 = arith.constant 0 : i32
    %c0_i32_0 = arith.constant 0 : i32
    %c0_i32_1 = arith.constant 0 : i32
    return %c0_i32, %c0_i32_0 : i32, i32
  }
  func.func @transform_3(%arg0: i32) -> (i32, i32) {
    %c0_i32 = arith.constant 0 : i32
    %c0_i32_0 = arith.constant 0 : i32
    %c0_i32_1 = arith.constant 0 : i32
    return %c0_i32, %c0_i32_0 : i32, i32
  }
  func.func @transform_4(%arg0: i32) -> (i32, i32) {
    %c0_i32 = arith.constant 0 : i32
    %c0_i32_0 = arith.constant 0 : i32
    return %c0_i32, %arg0 : i32, i32
  }
}

</mosaic_0001>

<llo_original>
// kernel: forward.2
$region0: #{forward.2}
  #allocation0 [shape = 'u32[]', space=smem, size = 0x4, offset = 0x4, fixed_abs, tag = 'smem constant byte address 0x4 - core index']
  #allocation1 [shape = 'u32[144,128]{1,0:T(1,128)}', space=vmem, size = 0x12000, scoped, tag = 'internal scratch']
  %s0 = inlined_call_operand.vmem [shape: f32[3,128], index: 0, kind: input, shape index: {}]
  %s1 = inlined_call_operand.vmem [shape: f32[6,128], index: 1, kind: input, shape index: {}]
  %s2 = inlined_call_operand.vmem [shape: f32[3,3], index: 2, kind: input, shape index: {}]
  %s3 = inlined_call_operand.vmem [shape: f32[3,3], index: 3, kind: output, shape index: {}]
  %s4 = sld [smem:[#allocation0]]
  $region26: #{forward.2} parent=0
    _
  %s6 = ssub.s32 1, %s4
  %s7 = scalar_select 0, %s6, %s4
  // Predicated region
  $region2: #{forward.2} parent=0 // pred_check
    _
  $region3: #{forward.2} parent=0 // pred_check_branch
    %9 = sbr.rel (0) target = $region5
  $region4: #{forward.2} parent=0 // pred_region
    _
  $region5: #{forward.2} parent=0 // pred_fallthru
    _
  // Predicated region
  $region6: #{forward.2} parent=0 // pred_check
    _
  $region7: #{forward.2} parent=0 // pred_check_branch
    %11 = sbr.rel (0) target = $region9
  $region8: #{forward.2} parent=0 // pred_region
    _
  $region9: #{forward.2} parent=0 // pred_fallthru
    _
  // Predicated region
  $region10: #{forward.2} parent=0 // pred_check
    _
  $region11: #{forward.2} parent=0 // pred_check_branch
    %13 = sbr.rel (0) target = $region13
  $region12: #{forward.2} parent=0 // pred_region
    _
  $region13: #{forward.2} parent=0 // pred_fallthru
    _
  %v14 = vld [vmem:[%s1] sm:$0x3f]
  %v15 = vld [vmem:[%s2] sm:$0x7]
  %v16 = vld [vmem:[%s0] sm:$0x7]
  %18 = vset.pattern.permute.xlu0 0
  %19 = vperm.xlu0 %18, %v15
  %v20 = vpop.permute.xlu0 %19
  %v22 = vlaneseq
  %v23 = vshrl.u32 %v22, 7
  %v24 = vsub.s32 4, %v23
  %v25 = vrot.slane %v14, %v24
  %v26 = vmul.f32 %v20, %v25
  %v27 = vadd.f32 %v16, %v26
  %28 = vset.pattern.permute.xlu0 1
  %29 = vperm.xlu0 %28, %v15
  %v30 = vpop.permute.xlu0 %29
  %v32 = vlaneseq
  %v33 = vshrl.u32 %v32, 7
  %v34 = vsub.s32 5, %v33
  %v35 = vrot.slane %v14, %v34
  %v36 = vmul.f32 %v30, %v35
  %v37 = vadd.f32 %v27, %v36
  %v38 = vsub.f32 %v37, %v14
  %v39 = vlaneseq
  %v40 = vshrl.u32 %v39, 7
  %v41 = vsub.s32 3, %v40
  %v42 = vrot.slane %v14, %v41
  %v43 = vmul.f32 %v38, %v42
  %44 = vset.pattern.permute.xlu0 2
  %45 = vperm.xlu0 %44, %v15
  %v46 = vpop.permute.xlu0 %45
  %v48 = vsub.f32 %v37, %v46
  %v50 = vrot.slane %v48, 1
  %v52 = vrot.slane %v48, 6
  %vm54 = vcmask 1041408
  %v55 = vsel %vm54, %v50, %v52
  %v57 = vrot.slane %v43, 2
  %v59 = vrot.slane %v43, 7
  %vm61 = vcmask 1040384
  %v62 = vsel %vm61, %v57, %v59
  %v63 = vmul.f32 %v55, %v62
  %v64 = vrot.slane %v48, 2
  %v66 = vrot.slane %v48, 7
  %v68 = vsel %vm61, %v64, %v66
  %v69 = vrot.slane %v43, 1
  %v71 = vrot.slane %v43, 6
  %v73 = vsel %vm54, %v69, %v71
  %v74 = vmul.f32 %v68, %v73
  %v75 = vsub.f32 %v63, %v74
  %vm76 = vcmask 1042432
  %v77 = vsel %vm76, %v37, 0.0
  %78 = vadd.xlane.f32.xlu0 %v77
  %v79 = vpop.xlane.xlu0 %78
  %v80 = vsel %vm76, %v43, 0.0
  %81 = vadd.xlane.f32.xlu0 %v80
  %v82 = vpop.xlane.xlu0 %81
  %v83 = vsel %vm76, %v75, 0.0
  %84 = vadd.xlane.f32.xlu0 %v83
  %v85 = vpop.xlane.xlu0 %84
  %vm86 = vcmask 7168
  %v87 = vsel %vm86, %v79, %v82
  %vm88 = vcmask 15360
  %v89 = vsel %vm88, %v87, %v85
  %p90 = scmp.eq.s32.totalorder 0, 0
  // Predicated region
  $region14: #{forward.2} parent=0 // pred_check
    %p91 = pneg %p90
  $region15: #{forward.2} parent=0 // pred_check_branch
    %93 = sbr.rel (%p91) target = $region17
  $region16: #{forward.2} parent=0 // pred_region
    %vm94 = vcmask 18432
    %95 = vst.msk [vmem:[%s3] sm:$0x7] %vm94, 0.0
  $region17: #{forward.2} parent=0 // pred_fallthru
    _
  %v96 = vld [vmem:[%s3] sm:$0x7]
  %v97 = vadd.f32 %v96, %v89
  %vm98 = vcmask 18432
  %99 = vst.msk [vmem:[%s3] sm:$0x7] %vm98, %v97
  // Predicated region
  $region18: #{forward.2} parent=0 // pred_check
    _
  $region19: #{forward.2} parent=0 // pred_check_branch
    %101 = sbr.rel (0) target = $region21
  $region20: #{forward.2} parent=0 // pred_region
    _
  $region21: #{forward.2} parent=0 // pred_fallthru
    _
  // Predicated region
  $region22: #{forward.2} parent=0 // pred_check
    _
  $region23: #{forward.2} parent=0 // pred_check_branch
    %103 = sbr.rel (0) target = $region25
  $region24: #{forward.2} parent=0 // pred_region
    _
  $region25: #{forward.2} parent=0 // pred_fallthru
    _

// kernel: forward.3
$region0: #{forward.3}
  #allocation0 [shape = 'u32[]', space=smem, size = 0x4, offset = 0x4, fixed_abs, tag = 'smem constant byte address 0x4 - core index']
  #allocation1 [shape = 'u32[144,128]{1,0:T(1,128)}', space=vmem, size = 0x12000, scoped, tag = 'internal scratch']
  %s0 = inlined_call_operand.vmem [shape: f32[3,128], index: 0, kind: input, shape index: {}]
  %s1 = inlined_call_operand.vmem [shape: f32[3,128], index: 1, kind: input, shape index: {}]
  %s2 = inlined_call_operand.vmem [shape: f32[3,3], index: 2, kind: input, shape index: {}]
  %s3 = inlined_call_operand.vmem [shape: f32[3,3], index: 3, kind: input, shape index: {}]
  %s4 = inlined_call_operand.vmem [shape: f32[3,128], index: 4, kind: output, shape index: {}]
  %s5 = sld [smem:[#allocation0]]
  $region26: #{forward.3} parent=0
    _
  %s7 = ssub.s32 1, %s5
  %s8 = scalar_select 0, %s7, %s5
  // Predicated region
  $region2: #{forward.3} parent=0 // pred_check
    _
  $region3: #{forward.3} parent=0 // pred_check_branch
    %10 = sbr.rel (0) target = $region5
  $region4: #{forward.3} parent=0 // pred_region
    _
  $region5: #{forward.3} parent=0 // pred_fallthru
    _
  // Predicated region
  $region6: #{forward.3} parent=0 // pred_check
    _
  $region7: #{forward.3} parent=0 // pred_check_branch
    %12 = sbr.rel (0) target = $region9
  $region8: #{forward.3} parent=0 // pred_region
    _
  $region9: #{forward.3} parent=0 // pred_fallthru
    _
  // Predicated region
  $region10: #{forward.3} parent=0 // pred_check
    _
  $region11: #{forward.3} parent=0 // pred_check_branch
    %14 = sbr.rel (0) target = $region13
  $region12: #{forward.3} parent=0 // pred_region
    _
  $region13: #{forward.3} parent=0 // pred_fallthru
    _
  // Predicated region
  $region14: #{forward.3} parent=0 // pred_check
    _
  $region15: #{forward.3} parent=0 // pred_check_branch
    %16 = sbr.rel (0) target = $region17
  $region16: #{forward.3} parent=0 // pred_region
    _
  $region17: #{forward.3} parent=0 // pred_fallthru
    _
  %v17 = vld [vmem:[%s1] sm:$0x7]
  %v18 = vld [vmem:[%s2] sm:$0x7]
  %v19 = vld [vmem:[%s0] sm:$0x7]
  %21 = vset.pattern.permute.xlu0 0
  %22 = vperm.xlu0 %21, %v18
  %v23 = vpop.permute.xlu0 %22
  %v25 = vlaneseq
  %v26 = vshrl.u32 %v25, 7
  %v27 = vsub.s32 1, %v26
  %v28 = vrot.slane %v17, %v27
  %v29 = vmul.f32 %v23, %v28
  %v30 = vadd.f32 %v19, %v29
  %31 = vset.pattern.permute.xlu0 1
  %32 = vperm.xlu0 %31, %v18
  %v33 = vpop.permute.xlu0 %32
  %v35 = vlaneseq
  %v36 = vshrl.u32 %v35, 7
  %v37 = vsub.s32 2, %v36
  %v38 = vrot.slane %v17, %v37
  %v39 = vmul.f32 %v33, %v38
  %v40 = vadd.f32 %v30, %v39
  %v41 = vld [vmem:[%s3] sm:$0x7]
  %v42 = vmul.f32 %v41, 0.020833334
  %v43 = vmul.f32 %v41, -4.1666665
  %44 = vrot.lane.b32.xlu0 %v18, 126
  %v45 = vpop.permute.xlu0 %44
  %v47 = vsub.f32 %v42, %v45
  %v49 = vrot.slane %v47, 1
  %v51 = vrot.slane %v47, 6
  %vm53 = vcmask 1041408
  %v54 = vsel %vm53, %v49, %v51
  %v56 = vrot.slane %v41, 2
  %v58 = vrot.slane %v41, 7
  %vm60 = vcmask 1040384
  %v61 = vsel %vm60, %v56, %v58
  %63 = vrot.lane.b32.xlu0 %v61, 127
  %v64 = vpop.permute.xlu0 %63
  %v66 = vmul.f32 %v54, %v64
  %v67 = vrot.slane %v47, 2
  %v69 = vrot.slane %v47, 7
  %v71 = vsel %vm60, %v67, %v69
  %v72 = vrot.slane %v41, 1
  %v74 = vrot.slane %v41, 6
  %v76 = vsel %vm53, %v72, %v74
  %78 = vrot.lane.b32.xlu0 %v76, 127
  %v79 = vpop.permute.xlu0 %78
  %v81 = vmul.f32 %v71, %v79
  %v82 = vsub.f32 %v66, %v81
  %84 = vrot.lane.b32.xlu0 %v82, 2
  %v85 = vpop.permute.xlu0 %84
  %v87 = vsub.f32 %v41, %v85
  %v88 = vmul.f32 %v87, -4.1666665
  %90 = vset.pattern.permute.xlu0 0
  %91 = vperm.xlu0 %90, %v42
  %v92 = vpop.permute.xlu0 %91
  %v94 = vsub.f32 %v40, %v92
  %v95 = vmul.f32 %v94, %v94
  %vm96 = vcmask 1042432
  %v97 = vsel %vm96, %v95, 0.0
  %v98 = vrot.slane %v97, 4
  %v99 = vadd.f32 %v97, %v98
  %v100 = vrot.slane %v99, 2
  %v101 = vadd.f32 %v99, %v100
  %v102 = vrot.slane %v101, 1
  %v103 = vadd.f32 %v101, %v102
  %vm104 = vcmp.gt.f32.partialorder %v17, 0.0
  %v105 = vsel %vm104, %v103, 1.0
  %v106 = vrcp.pop %v105
  %v107 = vmul.f32 %v105, %v106
  %v108 = vsub.f32 2.0, %v107
  %v109 = vmul.f32 %v106, %v108
  %v111 = vrot.slane %v88, 1
  %v113 = vrot.slane %v88, 6
  %v115 = vsel %vm53, %v111, %v113
  %v117 = vrot.slane %v94, 2
  %v119 = vrot.slane %v94, 7
  %v121 = vsel %vm60, %v117, %v119
  %123 = vset.pattern.permute.xlu0 2
  %124 = vperm.xlu0 %123, %v115
  %v125 = vpop.permute.xlu0 %124
  %v127 = vmul.f32 %v125, %v121
  %v128 = vrot.slane %v88, 2
  %v130 = vrot.slane %v88, 7
  %v132 = vsel %vm60, %v128, %v130
  %v133 = vrot.slane %v94, 1
  %v135 = vrot.slane %v94, 6
  %v137 = vsel %vm53, %v133, %v135
  %139 = vset.pattern.permute.xlu0 2
  %140 = vperm.xlu0 %139, %v132
  %v141 = vpop.permute.xlu0 %140
  %v143 = vmul.f32 %v141, %v137
  %v144 = vsub.f32 %v127, %v143
  %v145 = vlaneseq
  %v146 = vshrl.u32 %v145, 7
  %v147 = vsub.s32 0, %v146
  %v148 = vrot.slane %v109, %v147
  %v149 = vmul.f32 %v144, %v148
  %151 = vset.pattern.permute.xlu0 1
  %152 = vperm.xlu0 %151, %v43
  %v153 = vpop.permute.xlu0 %152
  %v155 = vadd.f32 %v153, %v149
  %156 = vst [vmem:[%s4] sm:$0x7] %v155
  // Predicated region
  $region18: #{forward.3} parent=0 // pred_check
    _
  $region19: #{forward.3} parent=0 // pred_check_branch
    %158 = sbr.rel (0) target = $region21
  $region20: #{forward.3} parent=0 // pred_region
    _
  $region21: #{forward.3} parent=0 // pred_fallthru
    _
  // Predicated region
  $region22: #{forward.3} parent=0 // pred_check
    _
  $region23: #{forward.3} parent=0 // pred_check_branch
    %160 = sbr.rel (0) target = $region25
  $region24: #{forward.3} parent=0 // pred_region
    _
  $region25: #{forward.3} parent=0 // pred_fallthru
    _

</llo_original>
